<compile_context>
chip_gen: v7x
topology: tpu7x:2x2x1
jax: 0.10.0
libtpu: 0.0.40
codegen_flags: <defaults>
</compile_context>

<pallas_src>
import functools

import jax
import jax.numpy as jnp
from jax.experimental import pallas as pl
from jax.experimental.pallas import tpu as pltpu


def _round_up(x, m):
    return ((x + m - 1) // m) * m


def _cdiv(a, b):
    return (a + b - 1) // b


def _ffn_kernel(x_ref, w1_ref, b1_ref, w2_ref, b2_ref, o_ref, acc_ref, *,
                compute_dtype):
    """One (row-tile i, d_inter-tile j) grid step of the fused FFN."""
    j = pl.program_id(1)

    @pl.when(j == 0)
    def _():
        acc_ref[...] = jnp.zeros_like(acc_ref)

    # Linear 1 (this d_inter slice) + bias + ReLU.  MXU operands are bf16 with
    # f32 accumulation; the bias-add / ReLU stay in f32 (no bf16 VPU on v5e).
    x = x_ref[...].astype(compute_dtype)
    h = jnp.dot(x, w1_ref[...], preferred_element_type=jnp.float32) + b1_ref[...]
    h = jnp.maximum(h, 0.0)
    # TODO(synk): dropout omitted — identity in eval-mode forward (training
    # parity would need an in-kernel pltpu.prng_seed/prng_random_bits mask).

    # Linear 2 partial product for this d_inter slice, accumulated in f32 VMEM.
    # The (tm, tile_n) intermediate `h` never leaves VMEM/vregs.
    acc_ref[...] += jnp.dot(h.astype(compute_dtype), w2_ref[...],
                            preferred_element_type=jnp.float32)

    @pl.when(j == pl.num_programs(1) - 1)
    def _():
        o_ref[...] = (acc_ref[...] + b2_ref[...]).astype(o_ref.dtype)


def _pick_inter_tile(d_inter):
    for tn in (512, 256, 128):
        if d_inter % tn == 0:
            return tn
    return d_inter


def positionwise_feedforward(x, w1, b1, w2, b2, *, tile_m=512,
                             compute_dtype=jnp.bfloat16):
    """out = relu(x @ w1 + b1) @ w2 + b2   (dropout = identity).

    x : (..., d_model)       activations; kept in their incoming dtype end-to-end
    w1: (d_model, d_inter)   ideally already stored in `compute_dtype`
    w2: (d_inter, d_model)   (pre-transposed vs torch nn.Linear's (out, in))
    b1: (d_inter,)  b2: (d_model,)   f32 biases
    """
    orig_shape = x.shape
    d_model = orig_shape[-1]
    d_inter = w1.shape[1]

    # Activations stay in their incoming dtype (no forced f32 at the boundary).
    x2 = x.reshape(-1, d_model)
    m = x2.shape[0]

    # Weights should already live in compute_dtype (cast once at creation time);
    # these casts are no-ops then, and only a fallback for f32-stored weights.
    if w1.dtype != compute_dtype:
        w1 = w1.astype(compute_dtype)
    if w2.dtype != compute_dtype:
        w2 = w2.astype(compute_dtype)
    b1r = b1.reshape(1, d_inter).astype(jnp.float32)
    b2r = b2.reshape(1, d_model).astype(jnp.float32)

    # Row tiling: sublane multiple depends on activation dtype (8 for 4-byte,
    # 16 for 2-byte packing).  Guarantee >= 2 row steps when m allows so that
    # v7x's two TensorCores both get work under "parallel".
    sub = 8 if jnp.dtype(x2.dtype).itemsize == 4 else 16
    tm = min(_round_up(m, sub), _round_up(tile_m, sub))
    if _cdiv(m, tm) < 2 and m > sub:
        tm = _round_up(_cdiv(m, 2), sub)
    m_pad = _round_up(m, tm)
    if m_pad != m:
        # Padded rows compute garbage that is sliced off afterwards.
        x2 = jnp.pad(x2, ((0, m_pad - m), (0, 0)))
    grid_m = m_pad // tm

    # d_inter tiling bounds VMEM independent of d_inter and streams w1/w2 under
    # the MXU; at small d_inter (one j step) the weights simply stay resident.
    tn = _pick_inter_tile(d_inter)
    grid_n = d_inter // tn

    # Explicit scoped-VMEM limit: double-buffered x/out tiles + double-buffered
    # weight slices + f32 accumulator + h intermediate + headroom.  Defaults are
    # 16 MiB (v5e) / 32 MiB (v6e, v7x); cap at v7x's 64 MiB physical per TC.
    act_b = jnp.dtype(x2.dtype).itemsize
    w_b = jnp.dtype(compute_dtype).itemsize
    vmem_needed = (
        2 * tm * d_model * act_b          # x row tiles
        + 2 * tm * d_model * act_b        # out row tiles
        + 2 * d_model * tn * w_b          # w1 slice
        + 2 * tn * d_model * w_b          # w2 slice
        + 2 * tn * 4 + 2 * d_model * 4    # b1 / b2
        + tm * d_model * 4                # f32 accumulator scratch
        + tm * tn * 4                     # f32 h intermediate
    )
    vmem_limit = min(max(vmem_needed * 3 // 2 + (4 << 20), 32 << 20), 64 << 20)

    out = pl.pallas_call(
        functools.partial(_ffn_kernel, compute_dtype=compute_dtype),
        out_shape=jax.ShapeDtypeStruct((m_pad, d_model), x2.dtype),
        grid_spec=pltpu.PrefetchScalarGridSpec(
            num_scalar_prefetch=0,
            grid=(grid_m, grid_n),
            in_specs=[
                pl.BlockSpec((tm, d_model), lambda i, j: (i, 0)),   # x (constant over j)
                pl.BlockSpec((d_model, tn), lambda i, j: (0, j)),   # w1 slice
                pl.BlockSpec((1, tn),       lambda i, j: (0, j)),   # b1 slice
                pl.BlockSpec((tn, d_model), lambda i, j: (j, 0)),   # w2 slice
                pl.BlockSpec((1, d_model),  lambda i, j: (0, 0)),   # b2 (resident)
            ],
            out_specs=pl.BlockSpec((tm, d_model), lambda i, j: (i, 0)),
            scratch_shapes=[pltpu.VMEM((tm, d_model), jnp.float32)],
        ),
        compiler_params=pltpu.CompilerParams(
            dimension_semantics=("parallel", "arbitrary"),
            vmem_limit_bytes=int(vmem_limit),
        ),
    )(x2, w1, b1r, w2, b2r)

    if m_pad != m:
        out = out[:m]
    return out.reshape(orig_shape)


if __name__ == "__main__":
    key = jax.random.PRNGKey(0)
    B, T = 2, 16
    D_MODEL, D_INTER = 128, 256   # lane-dense (multiples of 128)

    kx, kw1, kb1, kw2, kb2 = jax.random.split(key, 5)
    # Activations and weights stored in bf16 once at creation time (no per-call
    # convert pass); biases stay f32 for the f32 bias-add inside the kernel.
    x = jax.random.normal(kx, (B, T, D_MODEL), jnp.float32).astype(jnp.bfloat16)
    w1 = (jax.random.uniform(kw1, (D_MODEL, D_INTER), jnp.float32, -1.0, 1.0)
          / jnp.sqrt(D_MODEL)).astype(jnp.bfloat16)
    b1 = jax.random.uniform(kb1, (D_INTER,), jnp.float32, -1.0, 1.0) / jnp.sqrt(D_MODEL)
    w2 = (jax.random.uniform(kw2, (D_INTER, D_MODEL), jnp.float32, -1.0, 1.0)
          / jnp.sqrt(D_INTER)).astype(jnp.bfloat16)
    b2 = jax.random.uniform(kb2, (D_MODEL,), jnp.float32, -1.0, 1.0) / jnp.sqrt(D_INTER)

    out = positionwise_feedforward(x, w1, b1, w2, b2)
    jax.block_until_ready(out)
    assert out.shape == (B, T, D_MODEL)
    assert out.dtype == x.dtype

    # f32 reference on the same (bf16-quantized) inputs; remaining error is the
    # bf16 re-quantization of h between the two dots and bf16 output rounding.
    xf = x.astype(jnp.float32).reshape(-1, D_MODEL)
    ref = (jnp.maximum(xf @ w1.astype(jnp.float32) + b1, 0.0)
           @ w2.astype(jnp.float32) + b2).reshape(B, T, D_MODEL)
    err = float(jnp.max(jnp.abs(out.astype(jnp.float32) - ref)))
    assert err < 5e-2, f"max abs error {err}"

    print("KERNEL_OK")
</pallas_src>

<mosaic_0001>
module attributes {stable_mosaic.version = 11 : i64} {
  func.func @_ffn_kernel(%arg0: i32, %arg1: i32, %arg2: memref<16x128xbf16, #tpu.memory_space<vmem>>, %arg3: memref<128x256xbf16, #tpu.memory_space<vmem>>, %arg4: memref<1x256xf32, #tpu.memory_space<vmem>>, %arg5: memref<256x128xbf16, #tpu.memory_space<vmem>>, %arg6: memref<1x128xf32, #tpu.memory_space<vmem>>, %arg7: memref<16x128xbf16, #tpu.memory_space<vmem>>, %arg8: memref<16x128xf32, #tpu.memory_space<vmem>>) attributes {dimension_semantics = [#tpu.dimension_semantics<parallel>, #tpu.dimension_semantics<arbitrary>], iteration_bounds = array<i64: 2, 1>, scalar_prefetch = 0 : i64, scratch_operands = 1 : i64, tpu.core_type = #tpu.core_type<tc>, window_params = [{transform_indices = @transform_0, window_bounds = array<i64: 16, 128>}, {transform_indices = @transform_1, window_bounds = array<i64: 128, 256>}, {transform_indices = @transform_2, window_bounds = array<i64: 1, 256>}, {transform_indices = @transform_3, window_bounds = array<i64: 256, 128>}, {pipeline_mode = #tpu.pipeline_mode<synchronous>, transform_indices = @transform_4, window_bounds = array<i64: 1, 128>}, {transform_indices = @transform_5, window_bounds = array<i64: 16, 128>}]} {
    %c0_i32 = arith.constant 0 : i32
    %0 = arith.cmpi eq, %arg1, %c0_i32 : i32
    %1 = arith.extui %0 : i1 to i32
    %c0_i32_0 = arith.constant 0 : i32
    %2 = arith.cmpi ne, %1, %c0_i32_0 : i32
    scf.if %2 {
      %cst_16 = arith.constant 0.000000e+00 : f32
      %20 = vector.broadcast %cst_16 : f32 to vector<16x128xf32>
      %c0_17 = arith.constant 0 : index
      %c0_18 = arith.constant 0 : index
      %21 = vector.load %arg8[%c0_17, %c0_18] : memref<16x128xf32, #tpu.memory_space<vmem>>, vector<16x128xf32>
      tpu.vector_store %arg8[%c0_17, %c0_18], %20 {strides = array<i32>} : memref<16x128xf32, #tpu.memory_space<vmem>>, vector<16x128xf32>,
    } else {
    }
    %c0 = arith.constant 0 : index
    %c0_1 = arith.constant 0 : index
    %3 = vector.load %arg2[%c0, %c0_1] : memref<16x128xbf16, #tpu.memory_space<vmem>>, vector<16x128xbf16>
    %c0_2 = arith.constant 0 : index
    %c0_3 = arith.constant 0 : index
    %4 = vector.load %arg3[%c0_2, %c0_3] : memref<128x256xbf16, #tpu.memory_space<vmem>>, vector<128x256xbf16>
    %cst = arith.constant dense<0.000000e+00> : vector<16x256xf32>
    %5 = tpu.matmul %3, %4, %cst {dimension_numbers = #tpu.dot_dimension_numbers<[1], [0], [0], [1], [0, 0, 1, 1], [], []>} : vector<16x128xbf16>, vector<128x256xbf16>, vector<16x256xf32> -> vector<16x256xf32>
    %c0_4 = arith.constant 0 : index
    %c0_5 = arith.constant 0 : index
    %6 = vector.load %arg4[%c0_4, %c0_5] : memref<1x256xf32, #tpu.memory_space<vmem>>, vector<1x256xf32>
    %7 = vector.broadcast %6 : vector<1x256xf32> to vector<16x256xf32>
    %8 = arith.addf %5, %7 : vector<16x256xf32>
    %cst_6 = arith.constant 0.000000e+00 : f32
    %9 = vector.broadcast %cst_6 : f32 to vector<16x256xf32>
    %10 = arith.maximumf %8, %9 : vector<16x256xf32>
    %c0_7 = arith.constant 0 : index
    %c0_8 = arith.constant 0 : index
    %11 = vector.load %arg8[%c0_7, %c0_8] : memref<16x128xf32, #tpu.memory_space<vmem>>, vector<16x128xf32>
    %12 = arith.truncf %10 : vector<16x256xf32> to vector<16x256xbf16>
    %c0_9 = arith.constant 0 : index
    %c0_10 = arith.constant 0 : index
    %13 = vector.load %arg5[%c0_9, %c0_10] : memref<256x128xbf16, #tpu.memory_space<vmem>>, vector<256x128xbf16>
    %cst_11 = arith.constant dense<0.000000e+00> : vector<16x128xf32>
    %14 = tpu.matmul %12, %13, %cst_11 {dimension_numbers = #tpu.dot_dimension_numbers<[1], [0], [0], [1], [0, 0, 1, 1], [], []>} : vector<16x256xbf16>, vector<256x128xbf16>, vector<16x128xf32> -> vector<16x128xf32>
    %15 = arith.addf %11, %14 : vector<16x128xf32>
    %c0_12 = arith.constant 0 : index
    %c0_13 = arith.constant 0 : index
    %16 = vector.load %arg8[%c0_12, %c0_13] : memref<16x128xf32, #tpu.memory_space<vmem>>, vector<16x128xf32>
    tpu.vector_store %arg8[%c0_12, %c0_13], %15 {strides = array<i32>} : memref<16x128xf32, #tpu.memory_space<vmem>>, vector<16x128xf32>,
    %c0_i32_14 = arith.constant 0 : i32
    %17 = arith.cmpi eq, %arg1, %c0_i32_14 : i32
    %18 = arith.extui %17 : i1 to i32
    %c0_i32_15 = arith.constant 0 : i32
    %19 = arith.cmpi ne, %18, %c0_i32_15 : i32
    scf.if %19 {
      %c0_16 = arith.constant 0 : index
      %c0_17 = arith.constant 0 : index
      %20 = vector.load %arg8[%c0_16, %c0_17] : memref<16x128xf32, #tpu.memory_space<vmem>>, vector<16x128xf32>
      %c0_18 = arith.constant 0 : index
      %c0_19 = arith.constant 0 : index
      %21 = vector.load %arg6[%c0_18, %c0_19] : memref<1x128xf32, #tpu.memory_space<vmem>>, vector<1x128xf32>
      %22 = vector.broadcast %21 : vector<1x128xf32> to vector<16x128xf32>
      %23 = arith.addf %20, %22 : vector<16x128xf32>
      %24 = arith.truncf %23 : vector<16x128xf32> to vector<16x128xbf16>
      %c0_20 = arith.constant 0 : index
      %c0_21 = arith.constant 0 : index
      %25 = vector.load %arg7[%c0_20, %c0_21] : memref<16x128xbf16, #tpu.memory_space<vmem>>, vector<16x128xbf16>
      tpu.vector_store %arg7[%c0_20, %c0_21], %24 {strides = array<i32>} : memref<16x128xbf16, #tpu.memory_space<vmem>>, vector<16x128xbf16>,
    } else {
    }
    return
  }
  func.func @transform_0(%arg0: i32, %arg1: i32) -> (i32, i32) {
    %c0_i32 = arith.constant 0 : i32
    %c0_i32_0 = arith.constant 0 : i32
    return %arg0, %c0_i32 : i32, i32
  }
  func.func @transform_1(%arg0: i32, %arg1: i32) -> (i32, i32) {
    %c0_i32 = arith.constant 0 : i32
    %c0_i32_0 = arith.constant 0 : i32
    return %c0_i32, %arg1 : i32, i32
  }
  func.func @transform_2(%arg0: i32, %arg1: i32) -> (i32, i32) {
    %c0_i32 = arith.constant 0 : i32
    %c0_i32_0 = arith.constant 0 : i32
    return %c0_i32, %arg1 : i32, i32
  }
  func.func @transform_3(%arg0: i32, %arg1: i32) -> (i32, i32) {
    %c0_i32 = arith.constant 0 : i32
    %c0_i32_0 = arith.constant 0 : i32
    return %arg1, %c0_i32 : i32, i32
  }
  func.func @transform_4(%arg0: i32, %arg1: i32) -> (i32, i32) {
    %c0_i32 = arith.constant 0 : i32
    %c0_i32_0 = arith.constant 0 : i32
    %c0_i32_1 = arith.constant 0 : i32
    return %c0_i32, %c0_i32_0 : i32, i32
  }
  func.func @transform_5(%arg0: i32, %arg1: i32) -> (i32, i32) {
    %c0_i32 = arith.constant 0 : i32
    %c0_i32_0 = arith.constant 0 : i32
    return %arg0, %c0_i32 : i32, i32
  }
}

</mosaic_0001>

<llo_original>
// kernel: tpu_custom_call.1
$region0: #{tpu_custom_call.1}
  #allocation0 [shape = 'u32[]', space=smem, size = 0x4, offset = 0x4, fixed_abs, tag = 'smem constant byte address 0x4 - core index']
  #allocation1 [shape = 'u32[144,128]{1,0:T(1,128)}', space=vmem, size = 0x12000, scoped, tag = 'internal scratch']
  #allocation2 [shape = 'f32[16,128]{1,0:T(8,128)}', space=vmem, size = 0x2000, scoped, tag = 'scratch operand']
  %s0 = inlined_call_operand.hbm [shape: bf16[32,128], index: 0, kind: input, shape index: {}]
  %s1 = inlined_call_operand.hbm [shape: bf16[128,256], index: 1, kind: input, shape index: {}]
  %s2 = inlined_call_operand.vmem [shape: f32[1,256], index: 2, kind: input, shape index: {}]
  %s3 = inlined_call_operand.hbm [shape: bf16[256,128], index: 3, kind: input, shape index: {}]
  %s4 = inlined_call_operand.vmem [shape: f32[1,128], index: 4, kind: input, shape index: {}]
  %s5 = inlined_call_operand.hbm [shape: bf16[32,128], index: 5, kind: output, shape index: {}]
  %s6 = sld [smem:[#allocation0]]
  $region73: #{tpu_custom_call.1} parent=0
    _
  %s8 = ssub.s32 1, %s6
  %s9 = scalar_select 0, %s8, %s6
  $region1: #{tpu_custom_call.1} parent=0
    #allocation3 [shape = 'u8[8192]{0}', space=vmem, size = 0x2000, scoped, tag = 'input window, operand 0']
    #allocation4 [shape = 's32[2]{0}', space=sflag, size = 0x8, scoped, tag = 'scoped memory for tpu_custom_call.1']
    #allocation5 [shape = 's32[2]{0}', space=sflag, size = 0x8, scoped, tag = 'scoped memory for tpu_custom_call.1']
    #allocation6 [shape = 'u8[65536]{0}', space=vmem, size = 0x10000, scoped, tag = 'input window, operand 1, single buffered']
    #allocation7 [shape = 's32[1]{0}', space=sflag, size = 0x4, scoped, tag = 'scoped memory for tpu_custom_call.1']
    #allocation8 [shape = 'u8[65536]{0}', space=vmem, size = 0x10000, scoped, tag = 'input window, operand 3, single buffered']
    #allocation9 [shape = 'u8[8192]{0}', space=vmem, size = 0x2000, scoped, tag = 'output window, operand 0']
    %10 = vsyncpa [#allocation4], 0
    %s11 = scalar_lea.sflag [#allocation4], 1
    %12 = vsyncpa %s11, 0
    %13 = vsyncpa [#allocation7], 0
    %14 = vsyncpa [#allocation5], 0
    %s15 = scalar_lea.sflag [#allocation5], 1
    %16 = vsyncpa %s15, 0
    loop: start=0, step=1, limit=4
    $region2: #{tpu_custom_call.1} parent=1 // loop_pre_header
      _
    $region3: #{tpu_custom_call.1} parent=1 // loop_header
      %s18 = sphi 0, %s22
      %p19 = scmp.ge.s32.totalorder %s18, 4
      %s25 = sphi 0, %s37
      %s26 = sphi 0, %s33
      %s27 = sphi 0, %s25
      %s28 = sphi 0, %s26
      %s29 = sphi 0, %s27
      %s30 = sphi 0, %s28
      %s40 = sphi 0, %s42
      %s43 = sphi 0, %s40
      %s44 = sphi 0, %s43
      %s60 = sphi 0, %s44
      %s66 = sphi 0, %s68
      %s69 = sphi 0, %s66
      %s70 = sphi 0, %s69
      %s86 = sphi 0, %s70
      %s92 = sphi 0, %s94
      %s95 = sphi 0, %s92
      %s96 = sphi 0, %s95
      %s112 = sphi 0, %s96
      %s118 = sphi 0, %s120
      %s121 = sphi 0, %s118
      %s122 = sphi 0, %s121
      %s138 = sphi 0, %s122
      %s142 = sphi 0, %s142
      %s144 = sphi 0, %s142
      %s145 = sphi 0, %s144
      %s159 = sphi 0, %s145
      %s165 = sphi 0, %s167
      %s168 = sphi 0, %s165
      %s169 = sphi 0, %s168
      %s185 = sphi 0, %s169
    $region4: #{tpu_custom_call.1} parent=1 // loop_header_branch
      %21 = sbr.rel (%p19) target = $region8
    $region5: #{tpu_custom_call.1} parent=1 // loop_body
      %s23 = ssub.s32 %s18, 1
      %s24 = ssub.s32 %s18, 2
      %s31 = sadd.s32 1, %s26
      %p32 = scmp.ge.s32.totalorder %s31, 1
      %s33 = scalar_select %p32, 0, %s31
      %s34 = sadd.s32 1, %s25
      %s35 = scalar_select %p32, %s34, %s25
      %p36 = scmp.ge.s32.totalorder %s35, 2
      %s37 = scalar_select %p36, 0, %s35
      %s38 = ssub.s32 %s25, %s37
      %p39 = scmp.eq.s32.totalorder %s38, 0
      %s41 = sadd.s32 %s40, 1
      %s42 = scalar_select %p39, %s40, %s41
      %p45 = pneg %p39
      %p46 = scmp.eq.s32.totalorder %s18, 1
      %p47 = por %p45, %p46
      %p48 = scmp.ne.s32.totalorder %s40, %s43
      %p49 = scmp.eq.s32.totalorder %s18, 0
      %p50 = por %p48, %p49
      %p51 = scmp.ne.s32.totalorder %s40, %s43
      %p52 = scmp.eq.s32.totalorder %s23, 1
      %p53 = por %p51, %p52
      %p54 = scmp.ne.s32.totalorder %s43, %s44
      %p55 = scmp.eq.s32.totalorder %s23, 0
      %p56 = por %p54, %p55
      %p57 = scmp.ne.s32.totalorder %s43, %s44
      %p58 = scmp.eq.s32.totalorder %s24, 1
      %p59 = por %p57, %p58
      %p61 = scmp.ne.s32.totalorder %s44, %s60
      %p62 = scmp.eq.s32.totalorder %s24, 0
      %p63 = por %p61, %p62
      %s64 = ssub.s32 %s26, %s33
      %p65 = scmp.eq.s32.totalorder %s64, 0
      %s67 = sadd.s32 %s66, 1
      %s68 = scalar_select %p65, %s66, %s67
      %p71 = pneg %p65
      %p72 = scmp.eq.s32.totalorder %s18, 1
      %p73 = por %p71, %p72
      %p74 = scmp.ne.s32.totalorder %s66, %s69
      %p75 = scmp.eq.s32.totalorder %s18, 0
      %p76 = por %p74, %p75
      %p77 = scmp.ne.s32.totalorder %s66, %s69
      %p78 = scmp.eq.s32.totalorder %s23, 1
      %p79 = por %p77, %p78
      %p80 = scmp.ne.s32.totalorder %s69, %s70
      %p81 = scmp.eq.s32.totalorder %s23, 0
      %p82 = por %p80, %p81
      %p83 = scmp.ne.s32.totalorder %s69, %s70
      %p84 = scmp.eq.s32.totalorder %s24, 1
      %p85 = por %p83, %p84
      %p87 = scmp.ne.s32.totalorder %s70, %s86
      %p88 = scmp.eq.s32.totalorder %s24, 0
      %p89 = por %p87, %p88
      %s90 = ssub.s32 %s26, %s33
      %p91 = scmp.eq.s32.totalorder %s90, 0
      %s93 = sadd.s32 %s92, 1
      %s94 = scalar_select %p91, %s92, %s93
      %p97 = pneg %p91
      %p98 = scmp.eq.s32.totalorder %s18, 1
      %p99 = por %p97, %p98
      %p100 = scmp.ne.s32.totalorder %s92, %s95
      %p101 = scmp.eq.s32.totalorder %s18, 0
      %p102 = por %p100, %p101
      %p103 = scmp.ne.s32.totalorder %s92, %s95
      %p104 = scmp.eq.s32.totalorder %s23, 1
      %p105 = por %p103, %p104
      %p106 = scmp.ne.s32.totalorder %s95, %s96
      %p107 = scmp.eq.s32.totalorder %s23, 0
      %p108 = por %p106, %p107
      %p109 = scmp.ne.s32.totalorder %s95, %s96
      %p110 = scmp.eq.s32.totalorder %s24, 1
      %p111 = por %p109, %p110
      %p113 = scmp.ne.s32.totalorder %s96, %s112
      %p114 = scmp.eq.s32.totalorder %s24, 0
      %p115 = por %p113, %p114
      %s116 = ssub.s32 %s26, %s33
      %p117 = scmp.eq.s32.totalorder %s116, 0
      %s119 = sadd.s32 %s118, 1
      %s120 = scalar_select %p117, %s118, %s119
      %p123 = pneg %p117
      %p124 = scmp.eq.s32.totalorder %s18, 1
      %p125 = por %p123, %p124
      %p126 = scmp.ne.s32.totalorder %s118, %s121
      %p127 = scmp.eq.s32.totalorder %s18, 0
      %p128 = por %p126, %p127
      %p129 = scmp.ne.s32.totalorder %s118, %s121
      %p130 = scmp.eq.s32.totalorder %s23, 1
      %p131 = por %p129, %p130
      %p132 = scmp.ne.s32.totalorder %s121, %s122
      %p133 = scmp.eq.s32.totalorder %s23, 0
      %p134 = por %p132, %p133
      %p135 = scmp.ne.s32.totalorder %s121, %s122
      %p136 = scmp.eq.s32.totalorder %s24, 1
      %p137 = por %p135, %p136
      %p139 = scmp.ne.s32.totalorder %s122, %s138
      %p140 = scmp.eq.s32.totalorder %s24, 0
      %p141 = por %p139, %p140
      %s143 = sadd.s32 %s142, 1
      %p146 = scmp.eq.s32.totalorder %s18, 1
      %p147 = scmp.ne.s32.totalorder %s142, %s144
      %p148 = scmp.eq.s32.totalorder %s18, 0
      %p149 = por %p147, %p148
      %p150 = scmp.ne.s32.totalorder %s142, %s144
      %p151 = scmp.eq.s32.totalorder %s23, 1
      %p152 = por %p150, %p151
      %p153 = scmp.ne.s32.totalorder %s144, %s145
      %p154 = scmp.eq.s32.totalorder %s23, 0
      %p155 = por %p153, %p154
      %p156 = scmp.ne.s32.totalorder %s144, %s145
      %p157 = scmp.eq.s32.totalorder %s24, 1
      %p158 = por %p156, %p157
      %p160 = scmp.ne.s32.totalorder %s145, %s159
      %p161 = scmp.eq.s32.totalorder %s24, 0
      %p162 = por %p160, %p161
      %s163 = ssub.s32 %s25, %s37
      %p164 = scmp.eq.s32.totalorder %s163, 0
      %s166 = sadd.s32 %s165, 1
      %s167 = scalar_select %p164, %s165, %s166
      %p170 = pneg %p164
      %p171 = scmp.eq.s32.totalorder %s18, 1
      %p172 = por %p170, %p171
      %p173 = scmp.ne.s32.totalorder %s165, %s168
      %p174 = scmp.eq.s32.totalorder %s18, 0
      %p175 = por %p173, %p174
      %p176 = scmp.ne.s32.totalorder %s165, %s168
      %p177 = scmp.eq.s32.totalorder %s23, 1
      %p178 = por %p176, %p177
      %p179 = scmp.ne.s32.totalorder %s168, %s169
      %p180 = scmp.eq.s32.totalorder %s23, 0
      %p181 = por %p179, %p180
      %p182 = scmp.ne.s32.totalorder %s168, %s169
      %p183 = scmp.eq.s32.totalorder %s24, 1
      %p184 = por %p182, %p183
      %p186 = scmp.ne.s32.totalorder %s169, %s185
      %p187 = scmp.eq.s32.totalorder %s24, 0
      %p188 = por %p186, %p187
      %p189 = scmp.le.s32.totalorder 1, %s18
      %p190 = scmp.lt.s32.totalorder %s18, 3
      %p191 = pnand %p189, %p190
      %p192 = pneg %p191
      // Predicated region
      $region9: #{tpu_custom_call.1} parent=5 // pred_check
        _
      $region10: #{tpu_custom_call.1} parent=5 // pred_check_branch
        %194 = sbr.rel (%p191) target = $region12
      $region11: #{tpu_custom_call.1} parent=5 // pred_region
        %s195 = ssub.s32 %s18, 1
        // Predicated region
        $region13: #{tpu_custom_call.1} parent=11 // pred_check
          %p196 = pneg %p82
        $region14: #{tpu_custom_call.1} parent=11 // pred_check_branch
          %198 = sbr.rel (%p196) target = $region16
        $region15: #{tpu_custom_call.1} parent=11 // pred_region
          %s199 = smul.u32 2, %s28
          %s201 = ssub.s32 2048, 2048
          %202 = vsyncadd [#allocation7], %s201
          %s203 = smul.addr %s199, 64
          %s204 = scalar_lea.hbm %s1, %s203
          %s205 = sshll.u32 [#allocation6], 4
          %s206 = int_to_ptr.vmem [resolvable:$true] %s205
          %211 = dma.hbm_to_vmem [thread:$0]  %s204, 2048, %s206, [#allocation7], 128, 128, 8
        $region16: #{tpu_custom_call.1} parent=11 // pred_fallthru
          _
        // Predicated region
        $region17: #{tpu_custom_call.1} parent=11 // pred_check
          %p212 = pneg %p108
        $region18: #{tpu_custom_call.1} parent=11 // pred_check_branch
          %214 = sbr.rel (%p212) target = $region20
        $region19: #{tpu_custom_call.1} parent=11 // pred_region
          %s215 = smul.u32 2, %s28
          %p216 = scmp.lt.s32.totalorder %s215, 1
          %s217 = scalar_select %p216, %s215, 1
          %s218 = scalar_lea.vmem %s2, %s217
          %s219 = smul.u32 2, %s28
        $region20: #{tpu_custom_call.1} parent=11 // pred_fallthru
          _
        // Predicated region
        $region21: #{tpu_custom_call.1} parent=11 // pred_check
          %p220 = pneg %p134
        $region22: #{tpu_custom_call.1} parent=11 // pred_check_branch
          %222 = sbr.rel (%p220) target = $region24
        $region23: #{tpu_custom_call.1} parent=11 // pred_region
          %s223 = smul.u32 32, %s28
          %s225 = ssub.s32 2048, 2048
          %226 = vsyncadd [#allocation7], %s225
          %s227 = smul.addr %s223, 64
          %s228 = scalar_lea.hbm %s3, %s227
          %s229 = sshll.u32 [#allocation8], 4
          %s230 = int_to_ptr.vmem [resolvable:$true] %s229
          %235 = dma.hbm_to_vmem [thread:$0]  %s228, 2048, %s230, [#allocation7], 64, 64, 4
        $region24: #{tpu_custom_call.1} parent=11 // pred_fallthru
          _
        // Predicated region
        $region25: #{tpu_custom_call.1} parent=11 // pred_check
          %p236 = pneg %p155
        $region26: #{tpu_custom_call.1} parent=11 // pred_check_branch
          %238 = sbr.rel (%p236) target = $region28
        $region27: #{tpu_custom_call.1} parent=11 // pred_region
          _
        $region28: #{tpu_custom_call.1} parent=11 // pred_fallthru
          _
      $region12: #{tpu_custom_call.1} parent=5 // pred_fallthru
        _
      %p239 = scmp.lt.s32.totalorder %s18, 2
      // Predicated region
      $region29: #{tpu_custom_call.1} parent=5 // pred_check
        %p240 = pneg %p239
      $region30: #{tpu_custom_call.1} parent=5 // pred_check_branch
        %242 = sbr.rel (%p240) target = $region32
      $region31: #{tpu_custom_call.1} parent=5 // pred_region
        // Predicated region
        $region33: #{tpu_custom_call.1} parent=31 // pred_check
          %p243 = pneg %p50
        $region34: #{tpu_custom_call.1} parent=31 // pred_check_branch
          %245 = sbr.rel (%p243) target = $region36
        $region35: #{tpu_custom_call.1} parent=31 // pred_region
          %s246 = sand.u32 %s40, 1
          %s247 = scalar_lea.sflag [#allocation4], %s246
          %s248 = sand.u32 %s40, 1
          %s249 = smul.addr %s248, 8
          %s250 = scalar_lea.vmem [#allocation3], %s249
          %s251 = smul.u32 2, %s25
          %s253 = ssub.s32 128, 128
          %254 = vsyncadd %s247, %s253
          %s255 = smul.addr %s251, 64
          %s256 = scalar_lea.hbm %s0, %s255
          %s257 = sshll.u32 %s250, 4
          %s258 = int_to_ptr.vmem [resolvable:$true] %s257
          %263 = dma.hbm_to_vmem [thread:$0]  %s256, 128, %s258, %s247, 64, 64, 4
        $region36: #{tpu_custom_call.1} parent=31 // pred_fallthru
          _
      $region32: #{tpu_custom_call.1} parent=5 // pred_fallthru
        _
      %p264 = scmp.le.s32.totalorder 1, %s18
      %p265 = scmp.lt.s32.totalorder %s18, 3
      %p266 = pnand %p264, %p265
      %p267 = pneg %p266
      // Predicated region
      $region37: #{tpu_custom_call.1} parent=5 // pred_check
        _
      $region38: #{tpu_custom_call.1} parent=5 // pred_check_branch
        %269 = sbr.rel (%p266) target = $region40
      $region39: #{tpu_custom_call.1} parent=5 // pred_region
        %s270 = ssub.s32 %s18, 1
        %s271 = sand.u32 %s43, 1
        %s272 = scalar_lea.sflag [#allocation4], %s271
        %s273 = sand.u32 %s43, 1
        %s274 = smul.addr %s273, 8
        %s275 = scalar_lea.vmem [#allocation3], %s274
        // Predicated region
        $region41: #{tpu_custom_call.1} parent=39 // pred_check
          %p276 = pneg %p56
        $region42: #{tpu_custom_call.1} parent=39 // pred_check_branch
          %278 = sbr.rel (%p276) target = $region44
        $region43: #{tpu_custom_call.1} parent=39 // pred_region
          %279 = dma.done %s272, 128
        $region44: #{tpu_custom_call.1} parent=39 // pred_fallthru
          _
        // Predicated region
        $region45: #{tpu_custom_call.1} parent=39 // pred_check
          %p280 = pneg %p82
        $region46: #{tpu_custom_call.1} parent=39 // pred_check_branch
          %282 = sbr.rel (%p280) target = $region48
        $region47: #{tpu_custom_call.1} parent=39 // pred_region
          %283 = dma.done [#allocation7], 2048
        $region48: #{tpu_custom_call.1} parent=39 // pred_fallthru
          _
        // Predicated region
        $region49: #{tpu_custom_call.1} parent=39 // pred_check
          %p284 = pneg %p134
        $region50: #{tpu_custom_call.1} parent=39 // pred_check_branch
          %286 = sbr.rel (%p284) target = $region52
        $region51: #{tpu_custom_call.1} parent=39 // pred_region
          %287 = dma.done [#allocation7], 2048
        $region52: #{tpu_custom_call.1} parent=39 // pred_fallthru
          _
        %s288 = sand.u32 %s43, 1
        %s289 = scalar_lea.sflag [#allocation4], %s288
        %s290 = sand.u32 %s43, 1
        %s291 = smul.addr %s290, 8
        %s292 = scalar_lea.vmem [#allocation3], %s291
        %p293 = pneg %p56
        %p294 = pneg %p53
        %p295 = pneg %p82
        %p296 = pneg %p79
        %s297 = smul.u32 2, %s28
        %p298 = scmp.lt.s32.totalorder %s297, 1
        %s299 = scalar_select %p298, %s297, 1
        %s300 = scalar_lea.vmem %s2, %s299
        %p301 = pneg %p108
        %p302 = pneg %p105
        %p303 = pneg %p134
        %p304 = pneg %p131
        %p305 = pneg %p155
        %p306 = pneg %p152
        %p307 = pneg %p181
        %p308 = pneg %p178
        %s309 = sand.u32 %s168, 1
        %s310 = scalar_lea.sflag [#allocation5], %s309
        %s311 = sand.u32 %s168, 1
        %s312 = smul.addr %s311, 8
        %s313 = scalar_lea.vmem [#allocation9], %s312
        %s314 = smul.u32 2, %s27
        %s315 = smul.u32 2, %s28
        %s316 = smul.u32 2, %s28
        %p317 = scmp.lt.s32.totalorder %s316, 1
        %s318 = scalar_select %p317, %s316, 1
        %s319 = scalar_lea.vmem %s2, %s318
        %s320 = smul.u32 2, %s28
        %s321 = smul.u32 32, %s28
        %s322 = smul.u32 2, %s27
        %p324 = scmp.eq.s32.totalorder %s28, 0
        // Predicated region
        $region53: #{tpu_custom_call.1} parent=39 // pred_check
          %p325 = pneg %p324
        $region54: #{tpu_custom_call.1} parent=39 // pred_check_branch
          %327 = sbr.rel (%p325) target = $region56
        $region55: #{tpu_custom_call.1} parent=39 // pred_region
          %328 = vst [vmem:[#allocation2] sm:$0xff] 0.0
          %329 = vst [vmem:[#allocation2 + $0x8] sm:$0xff] 0.0
        $region56: #{tpu_custom_call.1} parent=39 // pred_fallthru
          _
        %v330 = vld [vmem:[%s275] sm:$0xf]
        %v331 = vld [vmem:[%s275 + $0x4] sm:$0xf]
        %v332 = vld [vmem:[#allocation6] sm:$0xff]
        %v333 = vld [vmem:[#allocation6 + $0x8] sm:$0xff]
        %v334 = vld [vmem:[#allocation6 + $0x10] sm:$0xff]
        %v335 = vld [vmem:[#allocation6 + $0x18] sm:$0xff]
        %v336 = vld [vmem:[#allocation6 + $0x20] sm:$0xff]
        %v337 = vld [vmem:[#allocation6 + $0x28] sm:$0xff]
        %v338 = vld [vmem:[#allocation6 + $0x30] sm:$0xff]
        %v339 = vld [vmem:[#allocation6 + $0x38] sm:$0xff]
        %v340 = vld [vmem:[#allocation6 + $0x40] sm:$0xff]
        %v341 = vld [vmem:[#allocation6 + $0x48] sm:$0xff]
        %v342 = vld [vmem:[#allocation6 + $0x50] sm:$0xff]
        %v343 = vld [vmem:[#allocation6 + $0x58] sm:$0xff]
        %v344 = vld [vmem:[#allocation6 + $0x60] sm:$0xff]
        %v345 = vld [vmem:[#allocation6 + $0x68] sm:$0xff]
        %v346 = vld [vmem:[#allocation6 + $0x70] sm:$0xff]
        %v347 = vld [vmem:[#allocation6 + $0x78] sm:$0xff]
        %v348 = vld [vmem:[%s319] sm:$0x3]
        %v350 = vlaneseq
        %v351 = vshrl.u32 %v350, 7
        %v352 = vsub.s32 0, %v351
        %v353 = vrot.slane %v348, %v352
        %v354 = vlaneseq
        %v355 = vshrl.u32 %v354, 7
        %v356 = vsub.s32 1, %v355
        %v357 = vrot.slane %v348, %v356
        %v362 = vunpack.c.l.b16 %v330
        %v363 = vunpack.c.l.b16 %v331
        %v364 = vpack.c.b16 %v363, %v362
        %v382 = vunpack.c.l.b16 %v332
        %v383 = vunpack.c.h.b16 %v332
        %v384 = vunpack.c.l.b16 %v333
        %v385 = vunpack.c.h.b16 %v333
        %v386 = vunpack.c.l.b16 %v334
        %v387 = vunpack.c.h.b16 %v334
        %v388 = vunpack.c.l.b16 %v335
        %v389 = vunpack.c.h.b16 %v335
        %v390 = vunpack.c.l.b16 %v336
        %v391 = vunpack.c.h.b16 %v336
        %v392 = vunpack.c.l.b16 %v337
        %v393 = vunpack.c.h.b16 %v337
        %v394 = vunpack.c.l.b16 %v338
        %v395 = vunpack.c.h.b16 %v338
        %v396 = vunpack.c.l.b16 %v339
        %v397 = vunpack.c.h.b16 %v339
        %v398 = vunpack.c.l.b16 %v340
        %v399 = vunpack.c.h.b16 %v340
        %v400 = vunpack.c.l.b16 %v341
        %v401 = vunpack.c.h.b16 %v341
        %v402 = vunpack.c.l.b16 %v342
        %v403 = vunpack.c.h.b16 %v342
        %v404 = vunpack.c.l.b16 %v343
        %v405 = vunpack.c.h.b16 %v343
        %v406 = vunpack.c.l.b16 %v344
        %v407 = vunpack.c.h.b16 %v344
        %v408 = vunpack.c.l.b16 %v345
        %v409 = vunpack.c.h.b16 %v345
        %v410 = vunpack.c.l.b16 %v346
        %v411 = vunpack.c.h.b16 %v346
        %v412 = vunpack.c.l.b16 %v347
        %v413 = vunpack.c.h.b16 %v347
        %v414 = vpack.c.b16 %v384, %v382
        %v415 = vpack.c.b16 %v385, %v383
        %v416 = vpack.c.b16 %v388, %v386
        %v417 = vpack.c.b16 %v389, %v387
        %v418 = vpack.c.b16 %v392, %v390
        %v419 = vpack.c.b16 %v393, %v391
        %v420 = vpack.c.b16 %v396, %v394
        %v421 = vpack.c.b16 %v397, %v395
        %v422 = vpack.c.b16 %v400, %v398
        %v423 = vpack.c.b16 %v401, %v399
        %v424 = vpack.c.b16 %v404, %v402
        %v425 = vpack.c.b16 %v405, %v403
        %v426 = vpack.c.b16 %v408, %v406
        %v427 = vpack.c.b16 %v409, %v407
        %v428 = vpack.c.b16 %v412, %v410
        %v429 = vpack.c.b16 %v413, %v411
        %446 = vmatprep.subr.bf16.mxu0 %v415
        %447 = vmatpush1.bf16.msra.mxu0 %v414
        %448 = vmatprep.subr.bf16.mxu0 %v417
        %449 = vmatpush1.bf16.msra.mxu0 %v416
        %450 = vmatprep.subr.bf16.mxu0 %v419
        %451 = vmatpush1.bf16.msra.mxu0 %v418
        %452 = vmatprep.subr.bf16.mxu0 %v421
        %453 = vmatpush1.bf16.msra.mxu0 %v420
        %454 = vmatprep.subr.bf16.mxu0 %v423
        %455 = vmatpush1.bf16.msra.mxu0 %v422
        %456 = vmatprep.subr.bf16.mxu0 %v425
        %457 = vmatpush1.bf16.msra.mxu0 %v424
        %458 = vmatprep.subr.bf16.mxu0 %v427
        %459 = vmatpush1.bf16.msra.mxu0 %v426
        %460 = vmatprep.subr.bf16.mxu0 %v429
        %461 = vmatpush1.bf16.msra.mxu0 %v428
        %462 = vmatprep.subr.bf16.mxu0 0
        %463 = vmatpush1.bf16.msra.mxu0 0
        %464 = vmatprep.subr.bf16.mxu0 0
        %465 = vmatpush1.bf16.msra.mxu0 0
        %466 = vmatprep.subr.bf16.mxu0 0
        %467 = vmatpush1.bf16.msra.mxu0 0
        %468 = vmatprep.subr.bf16.mxu0 0
        %469 = vmatpush1.bf16.msra.mxu0 0
        %470 = vmatprep.subr.bf16.mxu0 0
        %471 = vmatpush1.bf16.msra.mxu0 0
        %472 = vmatprep.subr.bf16.mxu0 0
        %473 = vmatpush1.bf16.msra.mxu0 0
        %474 = vmatprep.subr.bf16.mxu0 0
        %475 = vmatpush1.bf16.msra.mxu0 0
        %476 = vmatprep.subr.bf16.mxu0 0
        %477 = vmatpush1.bf16.msra.mxu0 0
        %478 = vmatprep.mubr.bf16.mxu0 0
        %479 = vmatmul.mubr.bf16.gmra.mrb[0].mxu0 %v364
        %v480 = vpop.f32.mrb[0].mxu0
        %v481 = vadd.f32 %v353, %v480
        %v482 = vpop.f32.mrb[0].mxu0
        %v483 = vadd.f32 %v357, %v482
        %v484 = vpop.f32.mrb[0].mxu0
        %v485 = vadd.f32 %v353, %v484
        %v486 = vpop.f32.mrb[0].mxu0
        %v487 = vadd.f32 %v357, %v486
        %488 = vdwg.mxu0
        %v489 = vmax.f32 %v481, 0.0
        %v490 = vmax.f32 %v483, 0.0
        %v491 = vmax.f32 %v485, 0.0
        %v492 = vmax.f32 %v487, 0.0
        %v493 = vld [vmem:[#allocation2] sm:$0xff]
        %v494 = vld [vmem:[#allocation2 + $0x8] sm:$0xff]
        %v495 = vpack.c.bf16 %v491, %v489
        %v496 = vpack.c.bf16 %v492, %v490
        %v497 = vld [vmem:[#allocation8] sm:$0xf]
        %v498 = vld [vmem:[#allocation8 + $0x4] sm:$0xf]
        %v499 = vld [vmem:[#allocation8 + $0x8] sm:$0xf]
        %v500 = vld [vmem:[#allocation8 + $0xc] sm:$0xf]
        %v501 = vld [vmem:[#allocation8 + $0x10] sm:$0xf]
        %v502 = vld [vmem:[#allocation8 + $0x14] sm:$0xf]
        %v503 = vld [vmem:[#allocation8 + $0x18] sm:$0xf]
        %v504 = vld [vmem:[#allocation8 + $0x1c] sm:$0xf]
        %v505 = vld [vmem:[#allocation8 + $0x20] sm:$0xf]
        %v506 = vld [vmem:[#allocation8 + $0x24] sm:$0xf]
        %v507 = vld [vmem:[#allocation8 + $0x28] sm:$0xf]
        %v508 = vld [vmem:[#allocation8 + $0x2c] sm:$0xf]
        %v509 = vld [vmem:[#allocation8 + $0x30] sm:$0xf]
        %v510 = vld [vmem:[#allocation8 + $0x34] sm:$0xf]
        %v511 = vld [vmem:[#allocation8 + $0x38] sm:$0xf]
        %v512 = vld [vmem:[#allocation8 + $0x3c] sm:$0xf]
        %v513 = vld [vmem:[#allocation8 + $0x40] sm:$0xf]
        %v514 = vld [vmem:[#allocation8 + $0x44] sm:$0xf]
        %v515 = vld [vmem:[#allocation8 + $0x48] sm:$0xf]
        %v516 = vld [vmem:[#allocation8 + $0x4c] sm:$0xf]
        %v517 = vld [vmem:[#allocation8 + $0x50] sm:$0xf]
        %v518 = vld [vmem:[#allocation8 + $0x54] sm:$0xf]
        %v519 = vld [vmem:[#allocation8 + $0x58] sm:$0xf]
        %v520 = vld [vmem:[#allocation8 + $0x5c] sm:$0xf]
        %v521 = vld [vmem:[#allocation8 + $0x60] sm:$0xf]
        %v522 = vld [vmem:[#allocation8 + $0x64] sm:$0xf]
        %v523 = vld [vmem:[#allocation8 + $0x68] sm:$0xf]
        %v524 = vld [vmem:[#allocation8 + $0x6c] sm:$0xf]
        %v525 = vld [vmem:[#allocation8 + $0x70] sm:$0xf]
        %v526 = vld [vmem:[#allocation8 + $0x74] sm:$0xf]
        %v527 = vld [vmem:[#allocation8 + $0x78] sm:$0xf]
        %v528 = vld [vmem:[#allocation8 + $0x7c] sm:$0xf]
        %v561 = vunpack.c.l.b16 %v497
        %v562 = vunpack.c.l.b16 %v498
        %v563 = vunpack.c.l.b16 %v499
        %v564 = vunpack.c.l.b16 %v500
        %v565 = vunpack.c.l.b16 %v501
        %v566 = vunpack.c.l.b16 %v502
        %v567 = vunpack.c.l.b16 %v503
        %v568 = vunpack.c.l.b16 %v504
        %v569 = vunpack.c.l.b16 %v505
        %v570 = vunpack.c.l.b16 %v506
        %v571 = vunpack.c.l.b16 %v507
        %v572 = vunpack.c.l.b16 %v508
        %v573 = vunpack.c.l.b16 %v509
        %v574 = vunpack.c.l.b16 %v510
        %v575 = vunpack.c.l.b16 %v511
        %v576 = vunpack.c.l.b16 %v512
        %v577 = vunpack.c.l.b16 %v513
        %v578 = vunpack.c.l.b16 %v514
        %v579 = vunpack.c.l.b16 %v515
        %v580 = vunpack.c.l.b16 %v516
        %v581 = vunpack.c.l.b16 %v517
        %v582 = vunpack.c.l.b16 %v518
        %v583 = vunpack.c.l.b16 %v519
        %v584 = vunpack.c.l.b16 %v520
        %v585 = vunpack.c.l.b16 %v521
        %v586 = vunpack.c.l.b16 %v522
        %v587 = vunpack.c.l.b16 %v523
        %v588 = vunpack.c.l.b16 %v524
        %v589 = vunpack.c.l.b16 %v525
        %v590 = vunpack.c.l.b16 %v526
        %v591 = vunpack.c.l.b16 %v527
        %v592 = vunpack.c.l.b16 %v528
        %v593 = vpack.c.b16 %v562, %v561
        %v594 = vpack.c.b16 %v564, %v563
        %v595 = vpack.c.b16 %v566, %v565
        %v596 = vpack.c.b16 %v568, %v567
        %v597 = vpack.c.b16 %v570, %v569
        %v598 = vpack.c.b16 %v572, %v571
        %v599 = vpack.c.b16 %v574, %v573
        %v600 = vpack.c.b16 %v576, %v575
        %v601 = vpack.c.b16 %v578, %v577
        %v602 = vpack.c.b16 %v580, %v579
        %v603 = vpack.c.b16 %v582, %v581
        %v604 = vpack.c.b16 %v584, %v583
        %v605 = vpack.c.b16 %v586, %v585
        %v606 = vpack.c.b16 %v588, %v587
        %v607 = vpack.c.b16 %v590, %v589
        %v608 = vpack.c.b16 %v592, %v591
        %625 = vmatprep.subr.bf16.mxu0 0
        %626 = vmatpush1.bf16.msra.mxu0 %v593
        %627 = vmatprep.subr.bf16.mxu0 0
        %628 = vmatpush1.bf16.msra.mxu0 %v594
        %629 = vmatprep.subr.bf16.mxu0 0
        %630 = vmatpush1.bf16.msra.mxu0 %v595
        %631 = vmatprep.subr.bf16.mxu0 0
        %632 = vmatpush1.bf16.msra.mxu0 %v596
        %633 = vmatprep.subr.bf16.mxu0 0
        %634 = vmatpush1.bf16.msra.mxu0 %v597
        %635 = vmatprep.subr.bf16.mxu0 0
        %636 = vmatpush1.bf16.msra.mxu0 %v598
        %637 = vmatprep.subr.bf16.mxu0 0
        %638 = vmatpush1.bf16.msra.mxu0 %v599
        %639 = vmatprep.subr.bf16.mxu0 0
        %640 = vmatpush1.bf16.msra.mxu0 %v600
        %641 = vmatprep.subr.bf16.mxu0 0
        %642 = vmatpush1.bf16.msra.mxu0 %v601
        %643 = vmatprep.subr.bf16.mxu0 0
        %644 = vmatpush1.bf16.msra.mxu0 %v602
        %645 = vmatprep.subr.bf16.mxu0 0
        %646 = vmatpush1.bf16.msra.mxu0 %v603
        %647 = vmatprep.subr.bf16.mxu0 0
        %648 = vmatpush1.bf16.msra.mxu0 %v604
        %649 = vmatprep.subr.bf16.mxu0 0
        %650 = vmatpush1.bf16.msra.mxu0 %v605
        %651 = vmatprep.subr.bf16.mxu0 0
        %652 = vmatpush1.bf16.msra.mxu0 %v606
        %653 = vmatprep.subr.bf16.mxu0 0
        %654 = vmatpush1.bf16.msra.mxu0 %v607
        %655 = vmatprep.subr.bf16.mxu0 0
        %656 = vmatpush1.bf16.msra.mxu0 %v608
        %657 = vmatprep.mubr.bf16.mxu0 %v496
        %658 = vmatmul.mubr.bf16.gmra.mrb[0].mxu0 %v495
        %v659 = vpop.f32.mrb[0].mxu0
        %v660 = vadd.f32 0.0, %v659
        %v661 = vpop.f32.mrb[0].mxu0
        %v662 = vpop.f32.mrb[0].mxu0
        %v663 = vadd.f32 0.0, %v662
        %v664 = vpop.f32.mrb[0].mxu0
        %665 = vdwg.mxu0
        %v666 = vadd.f32 %v493, %v660
        %v667 = vadd.f32 %v494, %v663
        %668 = vst [vmem:[#allocation2] sm:$0xff] %v666
        %669 = vst [vmem:[#allocation2 + $0x8] sm:$0xff] %v667
        // Predicated region
        $region57: #{tpu_custom_call.1} parent=39 // pred_check
          %p670 = pneg %p324
        $region58: #{tpu_custom_call.1} parent=39 // pred_check_branch
          %672 = sbr.rel (%p670) target = $region60
        $region59: #{tpu_custom_call.1} parent=39 // pred_region
          %v673 = vld [vmem:[#allocation2] sm:$0xff]
          %v674 = vld [vmem:[#allocation2 + $0x8] sm:$0xff]
          %v675 = vld [vmem:[%s4] sm:$0x1]
          %v677 = vlaneseq
          %v678 = vshrl.u32 %v677, 7
          %v679 = vsub.s32 0, %v678
          %v680 = vrot.slane %v675, %v679
          %v682 = vadd.f32 %v673, %v680
          %v683 = vadd.f32 %v674, %v680
          %v684 = vpack.c.bf16 %v683, %v682
          %v686 = vunpack.c.l.b16 %v684
          %v687 = vunpack.c.h.b16 %v684
          %v688 = vpack.c.b16 %v686, %v686
          %v689 = vpack.c.b16 %v687, %v687
          %692 = vst [vmem:[%s313] sm:$0xf] %v688
          %693 = vst [vmem:[%s313 + $0x4] sm:$0xf] %v689
        $region60: #{tpu_custom_call.1} parent=39 // pred_fallthru
          _
        %s694 = sand.u32 %s168, 1
        %s695 = scalar_lea.sflag [#allocation5], %s694
        %s696 = sand.u32 %s168, 1
        %s697 = smul.addr %s696, 8
        %s698 = scalar_lea.vmem [#allocation9], %s697
        // Predicated region
        $region61: #{tpu_custom_call.1} parent=39 // pred_check
          %p699 = pneg %p178
        $region62: #{tpu_custom_call.1} parent=39 // pred_check_branch
          %701 = sbr.rel (%p699) target = $region64
        $region63: #{tpu_custom_call.1} parent=39 // pred_region
          %s702 = smul.u32 2, %s27
          %s704 = ssub.s32 128, 128
          %705 = vsyncadd %s695, %s704
          %s706 = smul.addr %s702, 64
          %s707 = scalar_lea.hbm %s5, %s706
          %s708 = sshll.u32 %s698, 4
          %s709 = int_to_ptr.vmem [resolvable:$true] %s708
          %714 = dma.vmem_to_hbm [thread:$0]  %s709, 128, %s707, %s695, 64, 64, 4
        $region64: #{tpu_custom_call.1} parent=39 // pred_fallthru
          _
      $region40: #{tpu_custom_call.1} parent=5 // pred_fallthru
        _
      %p715 = scmp.le.s32.totalorder 2, %s18
      // Predicated region
      $region65: #{tpu_custom_call.1} parent=5 // pred_check
        %p716 = pneg %p715
      $region66: #{tpu_custom_call.1} parent=5 // pred_check_branch
        %718 = sbr.rel (%p716) target = $region68
      $region67: #{tpu_custom_call.1} parent=5 // pred_region
        %s719 = ssub.s32 %s18, 2
        // Predicated region
        $region69: #{tpu_custom_call.1} parent=67 // pred_check
          %p720 = pneg %p184
        $region70: #{tpu_custom_call.1} parent=67 // pred_check_branch
          %722 = sbr.rel (%p720) target = $region72
        $region71: #{tpu_custom_call.1} parent=67 // pred_region
          %s723 = sand.u32 %s169, 1
          %s724 = scalar_lea.sflag [#allocation5], %s723
          %s725 = sand.u32 %s169, 1
          %s726 = smul.addr %s725, 8
          %s727 = scalar_lea.vmem [#allocation9], %s726
          %728 = dma.done %s724, 128
        $region72: #{tpu_custom_call.1} parent=67 // pred_fallthru
          _
      $region68: #{tpu_custom_call.1} parent=5 // pred_fallthru
        _
    $region6: #{tpu_custom_call.1} parent=1 // loop_footer
      %s22 = sadd.s32 1, %s18
    $region7: #{tpu_custom_call.1} parent=1 // loop_footer_branch
      %17 = sbr.rel target = $region3
    $region8: #{tpu_custom_call.1} parent=1 // loop_exit
      _
    %729 = vsyncpa [#allocation4], 1
    %s730 = scalar_lea.sflag [#allocation4], 1
    %731 = vsyncpa %s730, 1
    %732 = vsyncpa [#allocation7], 1
    %733 = vsyncpa [#allocation5], 1
    %s734 = scalar_lea.sflag [#allocation5], 1
    %735 = vsyncpa %s734, 1

</llo_original>
